<compile_context>
chip_gen: v7x
topology: tpu7x:2x2x1
jax: 0.10.0
libtpu: 0.0.40
codegen_flags: <defaults>
</compile_context>

<pallas_src>
import functools

import jax
import jax.numpy as jnp
from jax.experimental import pallas as pl
from jax.experimental.pallas import tpu as pltpu


# ----------------------------- Pallas kernel -------------------------------

def _vip_diffpol_kernel(patches_ref, conv_w_ref, x_ref, w1_ref, w2_ref, b2_ref,
                        w3_ref, b3_ref, pred_ref, xbuf_ref,
                        *, b_pad, n_patch, vis_dim, vis_off):
    """Fused visual stem + noise-prediction MLP (single pallas_call).

    patches: (B_pad*P, 32) bf16 im2col patches; col 27 = 1.0 (conv-bias lane),
             padded-batch rows all zero.
    conv_w:  (32, Cf)      bf16; row 27 = conv bias, rows 28:32 = 0.
    x:       (B_pad, 128)  bf16 [noisy | temb | lang | 1 | 0 | vis-slot(=0)].
    w1:      (128, Hd)     bf16 [W1_noisy; W1_temb; W1_lang; b1; 0; W1_vis].
    w2:      (Hd, Hd)      bf16
    b2:      (1, Hd)       f32
    w3:      (Hd, 128)     bf16 (columns >= flat_act are zero)
    b3:      (1, 128)      f32
    pred:    (B_pad, 128)  f32 lane-dense output (wrapper slices [:B, :flat]).
    xbuf:    (B_pad, 128)  bf16 VMEM scratch for the merged layer-1 operand.
    """
    # --- frozen "R3M" stem: conv-as-matmul (bias folded in) + ReLU ----------
    h = jnp.dot(patches_ref[...], conv_w_ref[...],
                preferred_element_type=jnp.float32)            # (B_pad*P, Cf)
    h = jnp.maximum(h, 0.0)
    # f32 global average pool over the patch axis (VPU/XLU; no pool matmul)
    vis = jnp.sum(h.reshape(b_pad, n_patch, vis_dim), axis=1) * (1.0 / n_patch)

    # --- merged layer-1 operand: write vis into its reserved lanes ----------
    xbuf_ref[...] = x_ref[...]
    xbuf_ref[:, vis_off:] = vis.astype(jnp.bfloat16)
    h1 = jnp.dot(xbuf_ref[...], w1_ref[...],
                 preferred_element_type=jnp.float32)           # b1 folded in
    h1 = jnp.maximum(h1, 0.0)

    h2 = jnp.dot(h1.astype(jnp.bfloat16), w2_ref[...],
                 preferred_element_type=jnp.float32)
    h2 = jnp.maximum(h2 + b2_ref[...], 0.0)

    out = jnp.dot(h2.astype(jnp.bfloat16), w3_ref[...],
                  preferred_element_type=jnp.float32)
    pred_ref[...] = out + b3_ref[...]                          # unmasked store


def _vmem_spec():
    return pl.BlockSpec(memory_space=pltpu.MemorySpace.VMEM)


def vip_diffpol_fused(patches_flat, x_pad, params, *, b_pad, n_patch, vis_dim,
                      vis_off):
    hidden = params["w2"].shape[1]
    out_cols = params["w3"].shape[1]
    kc = patches_flat.shape[1]

    operands = (patches_flat, params["conv_w"], x_pad, params["w1"],
                params["w2"], params["b2"], params["w3"], params["b3"])

    flops = 2 * (patches_flat.shape[0] * kc * vis_dim          # conv stem
                 + b_pad * x_pad.shape[1] * hidden             # layer 1 (merged)
                 + b_pad * hidden * hidden                     # layer 2
                 + b_pad * hidden * out_cols)                  # layer 3
    bytes_accessed = (sum(int(a.size) * a.dtype.itemsize for a in operands)
                      + b_pad * out_cols * 4)

    kernel = functools.partial(_vip_diffpol_kernel, b_pad=b_pad,
                               n_patch=n_patch, vis_dim=vis_dim,
                               vis_off=vis_off)
    return pl.pallas_call(
        kernel,
        out_shape=jax.ShapeDtypeStruct((b_pad, out_cols), jnp.float32),
        in_specs=[_vmem_spec() for _ in operands],
        out_specs=_vmem_spec(),
        scratch_shapes=[pltpu.VMEM((b_pad, x_pad.shape[1]), jnp.bfloat16)],
        cost_estimate=pl.CostEstimate(flops=flops, transcendentals=0,
                                      bytes_accessed=bytes_accessed),
    )(*operands)


# ------------------------------- glue (JAX) --------------------------------

def im2col(x_nhwc, k=3, stride=2, pad=1):
    B, H, W, C = x_nhwc.shape
    xp = jnp.pad(x_nhwc, ((0, 0), (pad, pad), (pad, pad), (0, 0)))
    Ho = (H + 2 * pad - k) // stride + 1
    Wo = (W + 2 * pad - k) // stride + 1
    cols = []
    for di in range(k):
        for dj in range(k):
            cols.append(xp[:, di:di + stride * Ho:stride,
                           dj:dj + stride * Wo:stride, :])
    patches = jnp.stack(cols, axis=3)                 # (B, Ho, Wo, k*k, C)
    return patches.reshape(B, Ho * Wo, k * k * C)


def sinusoidal_embedding(t, dim):
    half = dim // 2
    freqs = jnp.exp(-jnp.log(10000.0) * jnp.arange(half, dtype=jnp.float32) / half)
    args = t.astype(jnp.float32)[:, None] * freqs[None, :]
    return jnp.concatenate([jnp.sin(args), jnp.cos(args)], axis=1)


def init_params(vis_dim, lang_dim, action_dim, action_horizon, hidden, temb_dim,
                conv_k=3, in_ch=3, conv_k_pad=32, dx_pad=128, out_pad=128,
                vis_off=96, seed=0):
    keys = jax.random.split(jax.random.PRNGKey(seed), 8)

    def dense(key, fan_in, fan_out):
        return (jax.random.normal(key, (fan_in, fan_out), jnp.float32)
                / jnp.sqrt(jnp.float32(fan_in)))

    flat_act = action_dim * action_horizon
    k_raw = conv_k * conv_k * in_ch                      # 27
    bias_col = flat_act + temb_dim + lang_dim            # 80

    # frozen "R3M" conv stem; conv bias folded into row k_raw (patch col = 1.0)
    conv_b = jnp.zeros((vis_dim,), jnp.float32)
    conv_w = jnp.zeros((conv_k_pad, vis_dim), jnp.float32)
    conv_w = conv_w.at[:k_raw].set(dense(keys[0], k_raw, vis_dim))
    conv_w = conv_w.at[k_raw].set(conv_b)

    # layer-1: concat([noisy,temb,lang,1,0,vis]) @ w1
    #   == concat([noisy, temb, vis, lang]) @ W1_ref + b1   (same algebra)
    w1a = dense(keys[1], flat_act, hidden)               # noisy-action rows
    w1b = dense(keys[2], temb_dim, hidden)               # timestep-emb rows
    w1c = dense(keys[3], vis_dim + lang_dim, hidden)     # obs rows: [vis | lang]
    w1vis, w1lang = w1c[:vis_dim], w1c[vis_dim:]
    b1 = jnp.zeros((hidden,), jnp.float32)
    w1 = jnp.zeros((dx_pad, hidden), jnp.float32)
    w1 = w1.at[:flat_act].set(w1a)
    w1 = w1.at[flat_act:flat_act + temb_dim].set(w1b)
    w1 = w1.at[flat_act + temb_dim:bias_col].set(w1lang)
    w1 = w1.at[bias_col].set(b1)
    w1 = w1.at[vis_off:vis_off + vis_dim].set(w1vis)

    # output projection, lane-padded to out_pad columns (zeros past flat_act)
    w3 = jnp.zeros((hidden, out_pad), jnp.float32)
    w3 = w3.at[:, :flat_act].set(dense(keys[5], hidden, flat_act))
    b3 = jnp.zeros((1, out_pad), jnp.float32)

    bf16 = jnp.bfloat16
    return {
        "conv_w": conv_w.astype(bf16),
        "w1": w1.astype(bf16),
        "w2": dense(keys[4], hidden, hidden).astype(bf16),
        "b2": jnp.zeros((1, hidden), jnp.float32),
        "w3": w3.astype(bf16),
        "b3": b3,
    }


class VIPDiffPolPallas:
    """JAX/Pallas re-implementation of VIP_DiffPol.forward at synthetic scale."""

    def __init__(self, action_dim=4, action_horizon=8, vis_dim=32, lang_dim=16,
                 hidden=128, temb_dim=32, num_train_timesteps=100):
        self.action_dim = action_dim
        self.action_horizon = action_horizon
        self.vis_dim = vis_dim
        self.lang_dim = lang_dim
        self.temb_dim = temb_dim
        self.flat_act = action_dim * action_horizon
        self.conv_k_pad = 32                 # im2col K=27 -> 32 (+bias lane 27)
        self.dx_pad = 128                    # merged layer-1 operand lanes
        self.out_pad = 128                   # lane-dense output columns
        self.bias_col = self.flat_act + temb_dim + lang_dim      # 80
        self.vis_off = self.dx_pad - vis_dim                     # 96
        assert self.bias_col < self.vis_off, "layer-1 lane layout overflow"
        assert self.flat_act <= self.out_pad
        self.T = num_train_timesteps
        self.params = init_params(vis_dim, lang_dim, action_dim, action_horizon,
                                  hidden, temb_dim, conv_k_pad=self.conv_k_pad,
                                  dx_pad=self.dx_pad, out_pad=self.out_pad,
                                  vis_off=self.vis_off)
        # DDPM linear-beta schedule (scheduler glue, stays outside the kernel)
        betas = jnp.linspace(1e-4, 0.02, self.T, dtype=jnp.float32)
        self.alphas_cumprod = jnp.cumprod(1.0 - betas)

    @functools.partial(jax.jit, static_argnums=0)
    def forward(self, rgb_nchw, lang_enc, actions, key):
        B = rgb_nchw.shape[0]
        b_pad = max(8, -(-B // 8) * 8)       # sublane-aligned MXU M dim

        # --- r3m visual encoding prep (frozen / no_grad in reference) ---
        rgb_nhwc = jnp.transpose(rgb_nchw, (0, 2, 3, 1))     # NCHW -> NHWC
        patches = im2col(rgb_nhwc)                           # (B, P, 27)
        P = patches.shape[1]
        k_raw = patches.shape[2]
        patches = jnp.pad(patches,
                          ((0, 0), (0, 0), (0, self.conv_k_pad - k_raw)))
        patches = patches.at[:, :, k_raw].set(1.0)           # conv-bias lane
        patches_full = jnp.zeros((b_pad, P, self.conv_k_pad), jnp.float32)
        patches_full = patches_full.at[:B].set(patches)      # zero padded batch
        patches_flat = (patches_full.reshape(b_pad * P, self.conv_k_pad)
                        .astype(jnp.bfloat16))

        # --- diffusion scheduler glue: sample noise/timesteps, add noise ---
        k_noise, k_t = jax.random.split(key)
        noise = jax.random.normal(k_noise, actions.shape, jnp.float32)
        t = jax.random.randint(k_t, (B,), 0, self.T)
        acp_t = self.alphas_cumprod[t]
        sa = jnp.sqrt(acp_t).reshape(B, 1)
        sb = jnp.sqrt(1.0 - acp_t).reshape(B, 1)
        temb = sinusoidal_embedding(t, self.temb_dim)

        actions_flat = actions.reshape(B, self.flat_act)
        noise_flat = noise.reshape(B, self.flat_act)
        noisy_flat = sa * actions_flat + sb * noise_flat     # DDPM add_noise

        # merged 128-lane layer-1 operand: [noisy | temb | lang | 1 | 0 | vis-slot]
        x_pad = jnp.zeros((b_pad, self.dx_pad), jnp.float32)
        x_pad = x_pad.at[:B, :self.flat_act].set(noisy_flat)
        x_pad = x_pad.at[:B, self.flat_act:self.flat_act + self.temb_dim].set(temb)
        x_pad = x_pad.at[:B, self.flat_act + self.temb_dim:self.bias_col].set(lang_enc)
        x_pad = x_pad.at[:B, self.bias_col].set(1.0)         # folds b1 into w1
        x_pad = x_pad.astype(jnp.bfloat16)

        # --- single fused Pallas kernel: vis stem + noise-prediction MLP ---
        pred_pad = vip_diffpol_fused(patches_flat, x_pad, self.params,
                                     b_pad=b_pad, n_patch=P,
                                     vis_dim=self.vis_dim, vis_off=self.vis_off)
        pred_flat = pred_pad[:B, :self.flat_act]
        noise_pred = pred_flat.reshape(B, self.action_horizon, self.action_dim)
        return noise, noise_pred


# --------------------------------- main ------------------------------------

if __name__ == "__main__":
    key = jax.random.PRNGKey(0)
    k_img, k_lang, k_act, k_fwd = jax.random.split(key, 4)

    B = 2
    rgb = jax.random.normal(k_img, (B, 3, 16, 16), jnp.float32)   # NCHW like torch
    lang = jax.random.normal(k_lang, (B, 16), jnp.float32)        # lang embedding
    actions = jax.random.normal(k_act, (B, 8, 4), jnp.float32)    # (B, horizon, act)

    model = VIPDiffPolPallas(action_dim=4, action_horizon=8,
                             vis_dim=32, lang_dim=16, hidden=128)
    noise, noise_pred = model.forward(rgb, lang, actions, k_fwd)
    jax.block_until_ready(noise_pred)

    assert noise.shape == actions.shape
    assert noise_pred.shape == actions.shape
    assert bool(jnp.all(jnp.isfinite(noise_pred)))
    print("KERNEL_OK")
</pallas_src>

<mosaic_0001>
module attributes {stable_mosaic.version = 11 : i64} {
  func.func @_vip_diffpol_kernel(%arg0: memref<512x32xbf16, #tpu.memory_space<vmem>>, %arg1: memref<32x32xbf16, #tpu.memory_space<vmem>>, %arg2: memref<8x128xbf16, #tpu.memory_space<vmem>>, %arg3: memref<128x128xbf16, #tpu.memory_space<vmem>>, %arg4: memref<128x128xbf16, #tpu.memory_space<vmem>>, %arg5: memref<1x128xf32, #tpu.memory_space<vmem>>, %arg6: memref<128x128xbf16, #tpu.memory_space<vmem>>, %arg7: memref<1x128xf32, #tpu.memory_space<vmem>>, %arg8: memref<8x128xf32, #tpu.memory_space<vmem>>, %arg9: memref<8x128xbf16, #tpu.memory_space<vmem>>) attributes {dimension_semantics = [], scalar_prefetch = 0 : i64, scratch_operands = 1 : i64, tpu.core_type = #tpu.core_type<tc>} {
    %c0 = arith.constant 0 : index
    %c0_0 = arith.constant 0 : index
    %0 = vector.load %arg0[%c0, %c0_0] : memref<512x32xbf16, #tpu.memory_space<vmem>>, vector<512x32xbf16>
    %c0_1 = arith.constant 0 : index
    %c0_2 = arith.constant 0 : index
    %1 = vector.load %arg1[%c0_1, %c0_2] : memref<32x32xbf16, #tpu.memory_space<vmem>>, vector<32x32xbf16>
    %cst = arith.constant dense<0.000000e+00> : vector<512x32xf32>
    %2 = tpu.matmul %0, %1, %cst {dimension_numbers = #tpu.dot_dimension_numbers<[1], [0], [0], [1], [0, 0, 1, 1], [], []>} : vector<512x32xbf16>, vector<32x32xbf16>, vector<512x32xf32> -> vector<512x32xf32>
    %cst_3 = arith.constant 0.000000e+00 : f32
    %3 = vector.broadcast %cst_3 : f32 to vector<512x32xf32>
    %4 = arith.maximumf %2, %3 : vector<512x32xf32>
    %5 = vector.shape_cast %4 : vector<512x32xf32> to vector<8x64x32xf32>
    %cst_4 = arith.constant dense<0.000000e+00> : vector<8x32xf32>
    %6 = vector.multi_reduction <add>, %5, %cst_4 [1] : vector<8x64x32xf32> to vector<8x32xf32>
    %cst_5 = arith.constant 1.562500e-02 : f32
    %7 = vector.broadcast %cst_5 : f32 to vector<8x32xf32>
    %8 = arith.mulf %6, %7 : vector<8x32xf32>
    %c0_6 = arith.constant 0 : index
    %c0_7 = arith.constant 0 : index
    %9 = vector.load %arg2[%c0_6, %c0_7] : memref<8x128xbf16, #tpu.memory_space<vmem>>, vector<8x128xbf16>
    %c0_8 = arith.constant 0 : index
    %c0_9 = arith.constant 0 : index
    %10 = vector.load %arg9[%c0_8, %c0_9] : memref<8x128xbf16, #tpu.memory_space<vmem>>, vector<8x128xbf16>
    tpu.vector_store %arg9[%c0_8, %c0_9], %9 {strides = array<i32>} : memref<8x128xbf16, #tpu.memory_space<vmem>>, vector<8x128xbf16>,
    %11 = arith.truncf %8 : vector<8x32xf32> to vector<8x32xbf16>
    %c0_10 = arith.constant 0 : index
    %c96 = arith.constant 96 : index
    %12 = vector.load %arg9[%c0_10, %c96] : memref<8x128xbf16, #tpu.memory_space<vmem>>, vector<8x32xbf16>
    tpu.vector_store %arg9[%c0_10, %c96], %11 {strides = array<i32>} : memref<8x128xbf16, #tpu.memory_space<vmem>>, vector<8x32xbf16>,
    %c0_11 = arith.constant 0 : index
    %c0_12 = arith.constant 0 : index
    %13 = vector.load %arg9[%c0_11, %c0_12] : memref<8x128xbf16, #tpu.memory_space<vmem>>, vector<8x128xbf16>
    %c0_13 = arith.constant 0 : index
    %c0_14 = arith.constant 0 : index
    %14 = vector.load %arg3[%c0_13, %c0_14] : memref<128x128xbf16, #tpu.memory_space<vmem>>, vector<128x128xbf16>
    %cst_15 = arith.constant dense<0.000000e+00> : vector<8x128xf32>
    %15 = tpu.matmul %13, %14, %cst_15 {dimension_numbers = #tpu.dot_dimension_numbers<[1], [0], [0], [1], [0, 0, 1, 1], [], []>} : vector<8x128xbf16>, vector<128x128xbf16>, vector<8x128xf32> -> vector<8x128xf32>
    %cst_16 = arith.constant 0.000000e+00 : f32
    %16 = vector.broadcast %cst_16 : f32 to vector<8x128xf32>
    %17 = arith.maximumf %15, %16 : vector<8x128xf32>
    %18 = arith.truncf %17 : vector<8x128xf32> to vector<8x128xbf16>
    %c0_17 = arith.constant 0 : index
    %c0_18 = arith.constant 0 : index
    %19 = vector.load %arg4[%c0_17, %c0_18] : memref<128x128xbf16, #tpu.memory_space<vmem>>, vector<128x128xbf16>
    %cst_19 = arith.constant dense<0.000000e+00> : vector<8x128xf32>
    %20 = tpu.matmul %18, %19, %cst_19 {dimension_numbers = #tpu.dot_dimension_numbers<[1], [0], [0], [1], [0, 0, 1, 1], [], []>} : vector<8x128xbf16>, vector<128x128xbf16>, vector<8x128xf32> -> vector<8x128xf32>
    %c0_20 = arith.constant 0 : index
    %c0_21 = arith.constant 0 : index
    %21 = vector.load %arg5[%c0_20, %c0_21] : memref<1x128xf32, #tpu.memory_space<vmem>>, vector<1x128xf32>
    %22 = vector.broadcast %21 : vector<1x128xf32> to vector<8x128xf32>
    %23 = arith.addf %20, %22 : vector<8x128xf32>
    %cst_22 = arith.constant 0.000000e+00 : f32
    %24 = vector.broadcast %cst_22 : f32 to vector<8x128xf32>
    %25 = arith.maximumf %23, %24 : vector<8x128xf32>
    %26 = arith.truncf %25 : vector<8x128xf32> to vector<8x128xbf16>
    %c0_23 = arith.constant 0 : index
    %c0_24 = arith.constant 0 : index
    %27 = vector.load %arg6[%c0_23, %c0_24] : memref<128x128xbf16, #tpu.memory_space<vmem>>, vector<128x128xbf16>
    %cst_25 = arith.constant dense<0.000000e+00> : vector<8x128xf32>
    %28 = tpu.matmul %26, %27, %cst_25 {dimension_numbers = #tpu.dot_dimension_numbers<[1], [0], [0], [1], [0, 0, 1, 1], [], []>} : vector<8x128xbf16>, vector<128x128xbf16>, vector<8x128xf32> -> vector<8x128xf32>
    %c0_26 = arith.constant 0 : index
    %c0_27 = arith.constant 0 : index
    %29 = vector.load %arg7[%c0_26, %c0_27] : memref<1x128xf32, #tpu.memory_space<vmem>>, vector<1x128xf32>
    %30 = vector.broadcast %29 : vector<1x128xf32> to vector<8x128xf32>
    %31 = arith.addf %28, %30 : vector<8x128xf32>
    %c0_28 = arith.constant 0 : index
    %c0_29 = arith.constant 0 : index
    %32 = vector.load %arg8[%c0_28, %c0_29] : memref<8x128xf32, #tpu.memory_space<vmem>>, vector<8x128xf32>
    tpu.vector_store %arg8[%c0_28, %c0_29], %31 {strides = array<i32>} : memref<8x128xf32, #tpu.memory_space<vmem>>, vector<8x128xf32>,
    return
  }
}

</mosaic_0001>

<llo_original>
// kernel: forward.1
$region0: #{forward.1}
  #allocation0 [shape = 'u32[]', space=smem, size = 0x4, offset = 0x4, fixed_abs, tag = 'smem constant byte address 0x4 - core index']
  #allocation1 [shape = 'u32[144,128]{1,0:T(1,128)}', space=vmem, size = 0x12000, scoped, tag = 'internal scratch']
  #allocation2 [shape = 'bf16[8,128]{1,0:T(8,128)(2,1)}', space=vmem, size = 0x800, scoped, tag = 'scratch operand']
  %s0 = inlined_call_operand.vmem [shape: bf16[512,32], index: 0, kind: input, shape index: {}]
  %s1 = inlined_call_operand.vmem [shape: bf16[32,32], index: 1, kind: input, shape index: {}]
  %s2 = inlined_call_operand.vmem [shape: bf16[8,128], index: 2, kind: input, shape index: {}]
  %s3 = inlined_call_operand.vmem [shape: bf16[128,128], index: 3, kind: input, shape index: {}]
  %s4 = inlined_call_operand.vmem [shape: bf16[128,128], index: 4, kind: input, shape index: {}]
  %s5 = inlined_call_operand.vmem [shape: f32[1,128], index: 5, kind: input, shape index: {}, may-alias: {5,7}]
  %s6 = inlined_call_operand.vmem [shape: bf16[128,128], index: 6, kind: input, shape index: {}]
  %s7 = inlined_call_operand.vmem [shape: f32[1,128], index: 7, kind: input, shape index: {}, may-alias: {5,7}]
  %s8 = inlined_call_operand.vmem [shape: f32[8,128], index: 8, kind: output, shape index: {}]
  %s9 = sld [smem:[#allocation0]]
  $region42: #{forward.1} parent=0
    _
  %s11 = ssub.s32 1, %s9
  %s12 = scalar_select 0, %s11, %s9
  // Predicated region
  $region2: #{forward.1} parent=0 // pred_check
    _
  $region3: #{forward.1} parent=0 // pred_check_branch
    %14 = sbr.rel (0) target = $region5
  $region4: #{forward.1} parent=0 // pred_region
    _
  $region5: #{forward.1} parent=0 // pred_fallthru
    _
  // Predicated region
  $region6: #{forward.1} parent=0 // pred_check
    _
  $region7: #{forward.1} parent=0 // pred_check_branch
    %16 = sbr.rel (0) target = $region9
  $region8: #{forward.1} parent=0 // pred_region
    _
  $region9: #{forward.1} parent=0 // pred_fallthru
    _
  // Predicated region
  $region10: #{forward.1} parent=0 // pred_check
    _
  $region11: #{forward.1} parent=0 // pred_check_branch
    %18 = sbr.rel (0) target = $region13
  $region12: #{forward.1} parent=0 // pred_region
    _
  $region13: #{forward.1} parent=0 // pred_fallthru
    _
  // Predicated region
  $region14: #{forward.1} parent=0 // pred_check
    _
  $region15: #{forward.1} parent=0 // pred_check_branch
    %20 = sbr.rel (0) target = $region17
  $region16: #{forward.1} parent=0 // pred_region
    _
  $region17: #{forward.1} parent=0 // pred_fallthru
    _
  // Predicated region
  $region18: #{forward.1} parent=0 // pred_check
    _
  $region19: #{forward.1} parent=0 // pred_check_branch
    %22 = sbr.rel (0) target = $region21
  $region20: #{forward.1} parent=0 // pred_region
    _
  $region21: #{forward.1} parent=0 // pred_fallthru
    _
  // Predicated region
  $region22: #{forward.1} parent=0 // pred_check
    _
  $region23: #{forward.1} parent=0 // pred_check_branch
    %24 = sbr.rel (0) target = $region25
  $region24: #{forward.1} parent=0 // pred_region
    _
  $region25: #{forward.1} parent=0 // pred_fallthru
    _
  // Predicated region
  $region26: #{forward.1} parent=0 // pred_check
    _
  $region27: #{forward.1} parent=0 // pred_check_branch
    %26 = sbr.rel (0) target = $region29
  $region28: #{forward.1} parent=0 // pred_region
    _
  $region29: #{forward.1} parent=0 // pred_fallthru
    _
  // Predicated region
  $region30: #{forward.1} parent=0 // pred_check
    _
  $region31: #{forward.1} parent=0 // pred_check_branch
    %28 = sbr.rel (0) target = $region33
  $region32: #{forward.1} parent=0 // pred_region
    _
  $region33: #{forward.1} parent=0 // pred_fallthru
    _
  %v30 = vld [vmem:[%s0] sm:$0xf]
  %v31 = vld [vmem:[%s0 + $0x4] sm:$0xf]
  %v32 = vld [vmem:[%s0 + $0x8] sm:$0xf]
  %v33 = vld [vmem:[%s0 + $0xc] sm:$0xf]
  %v34 = vld [vmem:[%s0 + $0x10] sm:$0xf]
  %v35 = vld [vmem:[%s0 + $0x14] sm:$0xf]
  %v36 = vld [vmem:[%s0 + $0x18] sm:$0xf]
  %v37 = vld [vmem:[%s0 + $0x1c] sm:$0xf]
  %v38 = vld [vmem:[%s0 + $0x20] sm:$0xf]
  %v39 = vld [vmem:[%s0 + $0x24] sm:$0xf]
  %v40 = vld [vmem:[%s0 + $0x28] sm:$0xf]
  %v41 = vld [vmem:[%s0 + $0x2c] sm:$0xf]
  %v42 = vld [vmem:[%s0 + $0x30] sm:$0xf]
  %v43 = vld [vmem:[%s0 + $0x34] sm:$0xf]
  %v44 = vld [vmem:[%s0 + $0x38] sm:$0xf]
  %v45 = vld [vmem:[%s0 + $0x3c] sm:$0xf]
  %v46 = vld [vmem:[%s0 + $0x40] sm:$0xf]
  %v47 = vld [vmem:[%s0 + $0x44] sm:$0xf]
  %v48 = vld [vmem:[%s0 + $0x48] sm:$0xf]
  %v49 = vld [vmem:[%s0 + $0x4c] sm:$0xf]
  %v50 = vld [vmem:[%s0 + $0x50] sm:$0xf]
  %v51 = vld [vmem:[%s0 + $0x54] sm:$0xf]
  %v52 = vld [vmem:[%s0 + $0x58] sm:$0xf]
  %v53 = vld [vmem:[%s0 + $0x5c] sm:$0xf]
  %v54 = vld [vmem:[%s0 + $0x60] sm:$0xf]
  %v55 = vld [vmem:[%s0 + $0x64] sm:$0xf]
  %v56 = vld [vmem:[%s0 + $0x68] sm:$0xf]
  %v57 = vld [vmem:[%s0 + $0x6c] sm:$0xf]
  %v58 = vld [vmem:[%s0 + $0x70] sm:$0xf]
  %v59 = vld [vmem:[%s0 + $0x74] sm:$0xf]
  %v60 = vld [vmem:[%s0 + $0x78] sm:$0xf]
  %v61 = vld [vmem:[%s0 + $0x7c] sm:$0xf]
  %v62 = vld [vmem:[%s0 + $0x80] sm:$0xf]
  %v63 = vld [vmem:[%s0 + $0x84] sm:$0xf]
  %v64 = vld [vmem:[%s0 + $0x88] sm:$0xf]
  %v65 = vld [vmem:[%s0 + $0x8c] sm:$0xf]
  %v66 = vld [vmem:[%s0 + $0x90] sm:$0xf]
  %v67 = vld [vmem:[%s0 + $0x94] sm:$0xf]
  %v68 = vld [vmem:[%s0 + $0x98] sm:$0xf]
  %v69 = vld [vmem:[%s0 + $0x9c] sm:$0xf]
  %v70 = vld [vmem:[%s0 + $0xa0] sm:$0xf]
  %v71 = vld [vmem:[%s0 + $0xa4] sm:$0xf]
  %v72 = vld [vmem:[%s0 + $0xa8] sm:$0xf]
  %v73 = vld [vmem:[%s0 + $0xac] sm:$0xf]
  %v74 = vld [vmem:[%s0 + $0xb0] sm:$0xf]
  %v75 = vld [vmem:[%s0 + $0xb4] sm:$0xf]
  %v76 = vld [vmem:[%s0 + $0xb8] sm:$0xf]
  %v77 = vld [vmem:[%s0 + $0xbc] sm:$0xf]
  %v78 = vld [vmem:[%s0 + $0xc0] sm:$0xf]
  %v79 = vld [vmem:[%s0 + $0xc4] sm:$0xf]
  %v80 = vld [vmem:[%s0 + $0xc8] sm:$0xf]
  %v81 = vld [vmem:[%s0 + $0xcc] sm:$0xf]
  %v82 = vld [vmem:[%s0 + $0xd0] sm:$0xf]
  %v83 = vld [vmem:[%s0 + $0xd4] sm:$0xf]
  %v84 = vld [vmem:[%s0 + $0xd8] sm:$0xf]
  %v85 = vld [vmem:[%s0 + $0xdc] sm:$0xf]
  %v86 = vld [vmem:[%s0 + $0xe0] sm:$0xf]
  %v87 = vld [vmem:[%s0 + $0xe4] sm:$0xf]
  %v88 = vld [vmem:[%s0 + $0xe8] sm:$0xf]
  %v89 = vld [vmem:[%s0 + $0xec] sm:$0xf]
  %v90 = vld [vmem:[%s0 + $0xf0] sm:$0xf]
  %v91 = vld [vmem:[%s0 + $0xf4] sm:$0xf]
  %v92 = vld [vmem:[%s0 + $0xf8] sm:$0xf]
  %v93 = vld [vmem:[%s0 + $0xfc] sm:$0xf]
  %v94 = vld [vmem:[%s1] sm:$0xf]
  %v95 = vld [vmem:[%s1 + $0x4] sm:$0xf]
  %v96 = vld [vmem:[%s1 + $0x8] sm:$0xf]
  %v97 = vld [vmem:[%s1 + $0xc] sm:$0xf]
  %v162 = vunpack.c.l.b16 %v30
  %v163 = vunpack.c.l.b16 %v31
  %v164 = vunpack.c.l.b16 %v32
  %v165 = vunpack.c.l.b16 %v33
  %v166 = vunpack.c.l.b16 %v34
  %v167 = vunpack.c.l.b16 %v35
  %v168 = vunpack.c.l.b16 %v36
  %v169 = vunpack.c.l.b16 %v37
  %v170 = vunpack.c.l.b16 %v38
  %v171 = vunpack.c.l.b16 %v39
  %v172 = vunpack.c.l.b16 %v40
  %v173 = vunpack.c.l.b16 %v41
  %v174 = vunpack.c.l.b16 %v42
  %v175 = vunpack.c.l.b16 %v43
  %v176 = vunpack.c.l.b16 %v44
  %v177 = vunpack.c.l.b16 %v45
  %v178 = vunpack.c.l.b16 %v46
  %v179 = vunpack.c.l.b16 %v47
  %v180 = vunpack.c.l.b16 %v48
  %v181 = vunpack.c.l.b16 %v49
  %v182 = vunpack.c.l.b16 %v50
  %v183 = vunpack.c.l.b16 %v51
  %v184 = vunpack.c.l.b16 %v52
  %v185 = vunpack.c.l.b16 %v53
  %v186 = vunpack.c.l.b16 %v54
  %v187 = vunpack.c.l.b16 %v55
  %v188 = vunpack.c.l.b16 %v56
  %v189 = vunpack.c.l.b16 %v57
  %v190 = vunpack.c.l.b16 %v58
  %v191 = vunpack.c.l.b16 %v59
  %v192 = vunpack.c.l.b16 %v60
  %v193 = vunpack.c.l.b16 %v61
  %v194 = vunpack.c.l.b16 %v62
  %v195 = vunpack.c.l.b16 %v63
  %v196 = vunpack.c.l.b16 %v64
  %v197 = vunpack.c.l.b16 %v65
  %v198 = vunpack.c.l.b16 %v66
  %v199 = vunpack.c.l.b16 %v67
  %v200 = vunpack.c.l.b16 %v68
  %v201 = vunpack.c.l.b16 %v69
  %v202 = vunpack.c.l.b16 %v70
  %v203 = vunpack.c.l.b16 %v71
  %v204 = vunpack.c.l.b16 %v72
  %v205 = vunpack.c.l.b16 %v73
  %v206 = vunpack.c.l.b16 %v74
  %v207 = vunpack.c.l.b16 %v75
  %v208 = vunpack.c.l.b16 %v76
  %v209 = vunpack.c.l.b16 %v77
  %v210 = vunpack.c.l.b16 %v78
  %v211 = vunpack.c.l.b16 %v79
  %v212 = vunpack.c.l.b16 %v80
  %v213 = vunpack.c.l.b16 %v81
  %v214 = vunpack.c.l.b16 %v82
  %v215 = vunpack.c.l.b16 %v83
  %v216 = vunpack.c.l.b16 %v84
  %v217 = vunpack.c.l.b16 %v85
  %v218 = vunpack.c.l.b16 %v86
  %v219 = vunpack.c.l.b16 %v87
  %v220 = vunpack.c.l.b16 %v88
  %v221 = vunpack.c.l.b16 %v89
  %v222 = vunpack.c.l.b16 %v90
  %v223 = vunpack.c.l.b16 %v91
  %v224 = vunpack.c.l.b16 %v92
  %v225 = vunpack.c.l.b16 %v93
  %v226 = vpack.c.b16 %v163, %v162
  %v227 = vpack.c.b16 %v165, %v164
  %v228 = vpack.c.b16 %v167, %v166
  %v229 = vpack.c.b16 %v169, %v168
  %v230 = vpack.c.b16 %v171, %v170
  %v231 = vpack.c.b16 %v173, %v172
  %v232 = vpack.c.b16 %v175, %v174
  %v233 = vpack.c.b16 %v177, %v176
  %v234 = vpack.c.b16 %v179, %v178
  %v235 = vpack.c.b16 %v181, %v180
  %v236 = vpack.c.b16 %v183, %v182
  %v237 = vpack.c.b16 %v185, %v184
  %v238 = vpack.c.b16 %v187, %v186
  %v239 = vpack.c.b16 %v189, %v188
  %v240 = vpack.c.b16 %v191, %v190
  %v241 = vpack.c.b16 %v193, %v192
  %v242 = vpack.c.b16 %v195, %v194
  %v243 = vpack.c.b16 %v197, %v196
  %v244 = vpack.c.b16 %v199, %v198
  %v245 = vpack.c.b16 %v201, %v200
  %v246 = vpack.c.b16 %v203, %v202
  %v247 = vpack.c.b16 %v205, %v204
  %v248 = vpack.c.b16 %v207, %v206
  %v249 = vpack.c.b16 %v209, %v208
  %v250 = vpack.c.b16 %v211, %v210
  %v251 = vpack.c.b16 %v213, %v212
  %v252 = vpack.c.b16 %v215, %v214
  %v253 = vpack.c.b16 %v217, %v216
  %v254 = vpack.c.b16 %v219, %v218
  %v255 = vpack.c.b16 %v221, %v220
  %v256 = vpack.c.b16 %v223, %v222
  %v257 = vpack.c.b16 %v225, %v224
  %v262 = vunpack.c.l.b16 %v94
  %v263 = vunpack.c.l.b16 %v95
  %v264 = vunpack.c.l.b16 %v96
  %v265 = vunpack.c.l.b16 %v97
  %v266 = vpack.c.b16 %v263, %v262
  %v267 = vpack.c.b16 %v265, %v264
  %vm270 = vcmask 261120
  %v272 = vsel %vm270, %v226, 0
  %v275 = vsel %vm270, %v227, 0
  %v278 = vsel %vm270, %v228, 0
  %v281 = vsel %vm270, %v229, 0
  %v284 = vsel %vm270, %v230, 0
  %v287 = vsel %vm270, %v231, 0
  %v290 = vsel %vm270, %v232, 0
  %v293 = vsel %vm270, %v233, 0
  %v296 = vsel %vm270, %v234, 0
  %v299 = vsel %vm270, %v235, 0
  %v302 = vsel %vm270, %v236, 0
  %v305 = vsel %vm270, %v237, 0
  %v308 = vsel %vm270, %v238, 0
  %v311 = vsel %vm270, %v239, 0
  %v314 = vsel %vm270, %v240, 0
  %v317 = vsel %vm270, %v241, 0
  %v320 = vsel %vm270, %v242, 0
  %v323 = vsel %vm270, %v243, 0
  %v326 = vsel %vm270, %v244, 0
  %v329 = vsel %vm270, %v245, 0
  %v332 = vsel %vm270, %v246, 0
  %v335 = vsel %vm270, %v247, 0
  %v338 = vsel %vm270, %v248, 0
  %v341 = vsel %vm270, %v249, 0
  %v344 = vsel %vm270, %v250, 0
  %v347 = vsel %vm270, %v251, 0
  %v350 = vsel %vm270, %v252, 0
  %v353 = vsel %vm270, %v253, 0
  %v356 = vsel %vm270, %v254, 0
  %v359 = vsel %vm270, %v255, 0
  %v362 = vsel %vm270, %v256, 0
  %v365 = vsel %vm270, %v257, 0
  %367 = vmatprep.subr.bf16.mxu0 0
  %368 = vmatpush1.bf16.msra.mxu0 %v266
  %369 = vmatprep.subr.bf16.mxu0 0
  %370 = vmatpush1.bf16.msra.mxu0 %v267
  %371 = vmatprep.subr.bf16.mxu0 0
  %372 = vmatpush1.bf16.msra.mxu0 0
  %373 = vmatprep.subr.bf16.mxu0 0
  %374 = vmatpush1.bf16.msra.mxu0 0
  %375 = vmatprep.subr.bf16.mxu0 0
  %376 = vmatpush1.bf16.msra.mxu0 0
  %377 = vmatprep.subr.bf16.mxu0 0
  %378 = vmatpush1.bf16.msra.mxu0 0
  %379 = vmatprep.subr.bf16.mxu0 0
  %380 = vmatpush1.bf16.msra.mxu0 0
  %381 = vmatprep.subr.bf16.mxu0 0
  %382 = vmatpush1.bf16.msra.mxu0 0
  %383 = vmatprep.subr.bf16.mxu0 0
  %384 = vmatpush1.bf16.msra.mxu0 0
  %385 = vmatprep.subr.bf16.mxu0 0
  %386 = vmatpush1.bf16.msra.mxu0 0
  %387 = vmatprep.subr.bf16.mxu0 0
  %388 = vmatpush1.bf16.msra.mxu0 0
  %389 = vmatprep.subr.bf16.mxu0 0
  %390 = vmatpush1.bf16.msra.mxu0 0
  %391 = vmatprep.subr.bf16.mxu0 0
  %392 = vmatpush1.bf16.msra.mxu0 0
  %393 = vmatprep.subr.bf16.mxu0 0
  %394 = vmatpush1.bf16.msra.mxu0 0
  %395 = vmatprep.subr.bf16.mxu0 0
  %396 = vmatpush1.bf16.msra.mxu0 0
  %397 = vmatprep.subr.bf16.mxu0 0
  %398 = vmatpush1.bf16.msra.mxu0 0
  %399 = vmatprep.mubr.bf16.mxu0 0
  %400 = vmatmul.mubr.bf16.gmra.mrb[0].mxu0 %v272
  %v401 = vpop.f32.mrb[0].mxu0
  %v402 = vadd.f32 0.0, %v401
  %v403 = vpop.f32.mrb[0].mxu0
  %v404 = vpop.f32.mrb[0].mxu0
  %v405 = vadd.f32 0.0, %v404
  %v406 = vpop.f32.mrb[0].mxu0
  %407 = vmatprep.mubr.bf16.mxu0 0
  %408 = vmatmul.mubr.bf16.gmra.mrb[0].mxu0 %v275
  %v409 = vpop.f32.mrb[0].mxu0
  %v410 = vadd.f32 0.0, %v409
  %v411 = vpop.f32.mrb[0].mxu0
  %v412 = vpop.f32.mrb[0].mxu0
  %v413 = vadd.f32 0.0, %v412
  %v414 = vpop.f32.mrb[0].mxu0
  %415 = vmatprep.mubr.bf16.mxu0 0
  %416 = vmatmul.mubr.bf16.gmra.mrb[0].mxu0 %v278
  %v417 = vpop.f32.mrb[0].mxu0
  %v418 = vadd.f32 0.0, %v417
  %v419 = vpop.f32.mrb[0].mxu0
  %v420 = vpop.f32.mrb[0].mxu0
  %v421 = vadd.f32 0.0, %v420
  %v422 = vpop.f32.mrb[0].mxu0
  %423 = vmatprep.mubr.bf16.mxu0 0
  %424 = vmatmul.mubr.bf16.gmra.mrb[0].mxu0 %v281
  %v425 = vpop.f32.mrb[0].mxu0
  %v426 = vadd.f32 0.0, %v425
  %v427 = vpop.f32.mrb[0].mxu0
  %v428 = vpop.f32.mrb[0].mxu0
  %v429 = vadd.f32 0.0, %v428
  %v430 = vpop.f32.mrb[0].mxu0
  %431 = vmatprep.mubr.bf16.mxu0 0
  %432 = vmatmul.mubr.bf16.gmra.mrb[0].mxu0 %v284
  %v433 = vpop.f32.mrb[0].mxu0
  %v434 = vadd.f32 0.0, %v433
  %v435 = vpop.f32.mrb[0].mxu0
  %v436 = vpop.f32.mrb[0].mxu0
  %v437 = vadd.f32 0.0, %v436
  %v438 = vpop.f32.mrb[0].mxu0
  %439 = vmatprep.mubr.bf16.mxu0 0
  %440 = vmatmul.mubr.bf16.gmra.mrb[0].mxu0 %v287
  %v441 = vpop.f32.mrb[0].mxu0
  %v442 = vadd.f32 0.0, %v441
  %v443 = vpop.f32.mrb[0].mxu0
  %v444 = vpop.f32.mrb[0].mxu0
  %v445 = vadd.f32 0.0, %v444
  %v446 = vpop.f32.mrb[0].mxu0
  %447 = vmatprep.mubr.bf16.mxu0 0
  %448 = vmatmul.mubr.bf16.gmra.mrb[0].mxu0 %v290
  %v449 = vpop.f32.mrb[0].mxu0
  %v450 = vadd.f32 0.0, %v449
  %v451 = vpop.f32.mrb[0].mxu0
  %v452 = vpop.f32.mrb[0].mxu0
  %v453 = vadd.f32 0.0, %v452
  %v454 = vpop.f32.mrb[0].mxu0
  %455 = vmatprep.mubr.bf16.mxu0 0
  %456 = vmatmul.mubr.bf16.gmra.mrb[0].mxu0 %v293
  %v457 = vpop.f32.mrb[0].mxu0
  %v458 = vadd.f32 0.0, %v457
  %v459 = vpop.f32.mrb[0].mxu0
  %v460 = vpop.f32.mrb[0].mxu0
  %v461 = vadd.f32 0.0, %v460
  %v462 = vpop.f32.mrb[0].mxu0
  %463 = vmatprep.mubr.bf16.mxu0 0
  %464 = vmatmul.mubr.bf16.gmra.mrb[0].mxu0 %v296
  %v465 = vpop.f32.mrb[0].mxu0
  %v466 = vadd.f32 0.0, %v465
  %v467 = vpop.f32.mrb[0].mxu0
  %v468 = vpop.f32.mrb[0].mxu0
  %v469 = vadd.f32 0.0, %v468
  %v470 = vpop.f32.mrb[0].mxu0
  %471 = vmatprep.mubr.bf16.mxu0 0
  %472 = vmatmul.mubr.bf16.gmra.mrb[0].mxu0 %v299
  %v473 = vpop.f32.mrb[0].mxu0
  %v474 = vadd.f32 0.0, %v473
  %v475 = vpop.f32.mrb[0].mxu0
  %v476 = vpop.f32.mrb[0].mxu0
  %v477 = vadd.f32 0.0, %v476
  %v478 = vpop.f32.mrb[0].mxu0
  %479 = vmatprep.mubr.bf16.mxu0 0
  %480 = vmatmul.mubr.bf16.gmra.mrb[0].mxu0 %v302
  %v481 = vpop.f32.mrb[0].mxu0
  %v482 = vadd.f32 0.0, %v481
  %v483 = vpop.f32.mrb[0].mxu0
  %v484 = vpop.f32.mrb[0].mxu0
  %v485 = vadd.f32 0.0, %v484
  %v486 = vpop.f32.mrb[0].mxu0
  %487 = vmatprep.mubr.bf16.mxu0 0
  %488 = vmatmul.mubr.bf16.gmra.mrb[0].mxu0 %v305
  %v489 = vpop.f32.mrb[0].mxu0
  %v490 = vadd.f32 0.0, %v489
  %v491 = vpop.f32.mrb[0].mxu0
  %v492 = vpop.f32.mrb[0].mxu0
  %v493 = vadd.f32 0.0, %v492
  %v494 = vpop.f32.mrb[0].mxu0
  %495 = vmatprep.mubr.bf16.mxu0 0
  %496 = vmatmul.mubr.bf16.gmra.mrb[0].mxu0 %v308
  %v497 = vpop.f32.mrb[0].mxu0
  %v498 = vadd.f32 0.0, %v497
  %v499 = vpop.f32.mrb[0].mxu0
  %v500 = vpop.f32.mrb[0].mxu0
  %v501 = vadd.f32 0.0, %v500
  %v502 = vpop.f32.mrb[0].mxu0
  %503 = vmatprep.mubr.bf16.mxu0 0
  %504 = vmatmul.mubr.bf16.gmra.mrb[0].mxu0 %v311
  %v505 = vpop.f32.mrb[0].mxu0
  %v506 = vadd.f32 0.0, %v505
  %v507 = vpop.f32.mrb[0].mxu0
  %v508 = vpop.f32.mrb[0].mxu0
  %v509 = vadd.f32 0.0, %v508
  %v510 = vpop.f32.mrb[0].mxu0
  %511 = vmatprep.mubr.bf16.mxu0 0
  %512 = vmatmul.mubr.bf16.gmra.mrb[0].mxu0 %v314
  %v513 = vpop.f32.mrb[0].mxu0
  %v514 = vadd.f32 0.0, %v513
  %v515 = vpop.f32.mrb[0].mxu0
  %v516 = vpop.f32.mrb[0].mxu0
  %v517 = vadd.f32 0.0, %v516
  %v518 = vpop.f32.mrb[0].mxu0
  %519 = vmatprep.mubr.bf16.mxu0 0
  %520 = vmatmul.mubr.bf16.gmra.mrb[0].mxu0 %v317
  %v521 = vpop.f32.mrb[0].mxu0
  %v522 = vadd.f32 0.0, %v521
  %v523 = vpop.f32.mrb[0].mxu0
  %v524 = vpop.f32.mrb[0].mxu0
  %v525 = vadd.f32 0.0, %v524
  %v526 = vpop.f32.mrb[0].mxu0
  %527 = vmatprep.mubr.bf16.mxu0 0
  %528 = vmatmul.mubr.bf16.gmra.mrb[0].mxu0 %v320
  %v529 = vpop.f32.mrb[0].mxu0
  %v530 = vadd.f32 0.0, %v529
  %v531 = vpop.f32.mrb[0].mxu0
  %v532 = vpop.f32.mrb[0].mxu0
  %v533 = vadd.f32 0.0, %v532
  %v534 = vpop.f32.mrb[0].mxu0
  %535 = vmatprep.mubr.bf16.mxu0 0
  %536 = vmatmul.mubr.bf16.gmra.mrb[0].mxu0 %v323
  %v537 = vpop.f32.mrb[0].mxu0
  %v538 = vadd.f32 0.0, %v537
  %v539 = vpop.f32.mrb[0].mxu0
  %v540 = vpop.f32.mrb[0].mxu0
  %v541 = vadd.f32 0.0, %v540
  %v542 = vpop.f32.mrb[0].mxu0
  %543 = vmatprep.mubr.bf16.mxu0 0
  %544 = vmatmul.mubr.bf16.gmra.mrb[0].mxu0 %v326
  %v545 = vpop.f32.mrb[0].mxu0
  %v546 = vadd.f32 0.0, %v545
  %v547 = vpop.f32.mrb[0].mxu0
  %v548 = vpop.f32.mrb[0].mxu0
  %v549 = vadd.f32 0.0, %v548
  %v550 = vpop.f32.mrb[0].mxu0
  %551 = vmatprep.mubr.bf16.mxu0 0
  %552 = vmatmul.mubr.bf16.gmra.mrb[0].mxu0 %v329
  %v553 = vpop.f32.mrb[0].mxu0
  %v554 = vadd.f32 0.0, %v553
  %v555 = vpop.f32.mrb[0].mxu0
  %v556 = vpop.f32.mrb[0].mxu0
  %v557 = vadd.f32 0.0, %v556
  %v558 = vpop.f32.mrb[0].mxu0
  %559 = vmatprep.mubr.bf16.mxu0 0
  %560 = vmatmul.mubr.bf16.gmra.mrb[0].mxu0 %v332
  %v561 = vpop.f32.mrb[0].mxu0
  %v562 = vadd.f32 0.0, %v561
  %v563 = vpop.f32.mrb[0].mxu0
  %v564 = vpop.f32.mrb[0].mxu0
  %v565 = vadd.f32 0.0, %v564
  %v566 = vpop.f32.mrb[0].mxu0
  %567 = vmatprep.mubr.bf16.mxu0 0
  %568 = vmatmul.mubr.bf16.gmra.mrb[0].mxu0 %v335
  %v569 = vpop.f32.mrb[0].mxu0
  %v570 = vadd.f32 0.0, %v569
  %v571 = vpop.f32.mrb[0].mxu0
  %v572 = vpop.f32.mrb[0].mxu0
  %v573 = vadd.f32 0.0, %v572
  %v574 = vpop.f32.mrb[0].mxu0
  %575 = vmatprep.mubr.bf16.mxu0 0
  %576 = vmatmul.mubr.bf16.gmra.mrb[0].mxu0 %v338
  %v577 = vpop.f32.mrb[0].mxu0
  %v578 = vadd.f32 0.0, %v577
  %v579 = vpop.f32.mrb[0].mxu0
  %v580 = vpop.f32.mrb[0].mxu0
  %v581 = vadd.f32 0.0, %v580
  %v582 = vpop.f32.mrb[0].mxu0
  %583 = vmatprep.mubr.bf16.mxu0 0
  %584 = vmatmul.mubr.bf16.gmra.mrb[0].mxu0 %v341
  %v585 = vpop.f32.mrb[0].mxu0
  %v586 = vadd.f32 0.0, %v585
  %v587 = vpop.f32.mrb[0].mxu0
  %v588 = vpop.f32.mrb[0].mxu0
  %v589 = vadd.f32 0.0, %v588
  %v590 = vpop.f32.mrb[0].mxu0
  %591 = vmatprep.mubr.bf16.mxu0 0
  %592 = vmatmul.mubr.bf16.gmra.mrb[0].mxu0 %v344
  %v593 = vpop.f32.mrb[0].mxu0
  %v594 = vadd.f32 0.0, %v593
  %v595 = vpop.f32.mrb[0].mxu0
  %v596 = vpop.f32.mrb[0].mxu0
  %v597 = vadd.f32 0.0, %v596
  %v598 = vpop.f32.mrb[0].mxu0
  %599 = vmatprep.mubr.bf16.mxu0 0
  %600 = vmatmul.mubr.bf16.gmra.mrb[0].mxu0 %v347
  %v601 = vpop.f32.mrb[0].mxu0
  %v602 = vadd.f32 0.0, %v601
  %v603 = vpop.f32.mrb[0].mxu0
  %v604 = vpop.f32.mrb[0].mxu0
  %v605 = vadd.f32 0.0, %v604
  %v606 = vpop.f32.mrb[0].mxu0
  %607 = vmatprep.mubr.bf16.mxu0 0
  %608 = vmatmul.mubr.bf16.gmra.mrb[0].mxu0 %v350
  %v609 = vpop.f32.mrb[0].mxu0
  %v610 = vadd.f32 0.0, %v609
  %v611 = vpop.f32.mrb[0].mxu0
  %v612 = vpop.f32.mrb[0].mxu0
  %v613 = vadd.f32 0.0, %v612
  %v614 = vpop.f32.mrb[0].mxu0
  %615 = vmatprep.mubr.bf16.mxu0 0
  %616 = vmatmul.mubr.bf16.gmra.mrb[0].mxu0 %v353
  %v617 = vpop.f32.mrb[0].mxu0
  %v618 = vadd.f32 0.0, %v617
  %v619 = vpop.f32.mrb[0].mxu0
  %v620 = vpop.f32.mrb[0].mxu0
  %v621 = vadd.f32 0.0, %v620
  %v622 = vpop.f32.mrb[0].mxu0
  %623 = vmatprep.mubr.bf16.mxu0 0
  %624 = vmatmul.mubr.bf16.gmra.mrb[0].mxu0 %v356
  %v625 = vpop.f32.mrb[0].mxu0
  %v626 = vadd.f32 0.0, %v625
  %v627 = vpop.f32.mrb[0].mxu0
  %v628 = vpop.f32.mrb[0].mxu0
  %v629 = vadd.f32 0.0, %v628
  %v630 = vpop.f32.mrb[0].mxu0
  %631 = vmatprep.mubr.bf16.mxu0 0
  %632 = vmatmul.mubr.bf16.gmra.mrb[0].mxu0 %v359
  %v633 = vpop.f32.mrb[0].mxu0
  %v634 = vadd.f32 0.0, %v633
  %v635 = vpop.f32.mrb[0].mxu0
  %v636 = vpop.f32.mrb[0].mxu0
  %v637 = vadd.f32 0.0, %v636
  %v638 = vpop.f32.mrb[0].mxu0
  %639 = vmatprep.mubr.bf16.mxu0 0
  %640 = vmatmul.mubr.bf16.gmra.mrb[0].mxu0 %v362
  %v641 = vpop.f32.mrb[0].mxu0
  %v642 = vadd.f32 0.0, %v641
  %v643 = vpop.f32.mrb[0].mxu0
  %v644 = vpop.f32.mrb[0].mxu0
  %v645 = vadd.f32 0.0, %v644
  %v646 = vpop.f32.mrb[0].mxu0
  %647 = vmatprep.mubr.bf16.mxu0 0
  %648 = vmatmul.mubr.bf16.gmra.mrb[0].mxu0 %v365
  %v649 = vpop.f32.mrb[0].mxu0
  %v650 = vadd.f32 0.0, %v649
  %v651 = vpop.f32.mrb[0].mxu0
  %v652 = vpop.f32.mrb[0].mxu0
  %v653 = vadd.f32 0.0, %v652
  %v654 = vpop.f32.mrb[0].mxu0
  %655 = vdwg.mxu0
  %v656 = vmax.f32 %v402, 0.0
  %v657 = vmax.f32 %v405, 0.0
  %v658 = vmax.f32 %v410, 0.0
  %v659 = vmax.f32 %v413, 0.0
  %v660 = vmax.f32 %v418, 0.0
  %v661 = vmax.f32 %v421, 0.0
  %v662 = vmax.f32 %v426, 0.0
  %v663 = vmax.f32 %v429, 0.0
  %v664 = vmax.f32 %v434, 0.0
  %v665 = vmax.f32 %v437, 0.0
  %v666 = vmax.f32 %v442, 0.0
  %v667 = vmax.f32 %v445, 0.0
  %v668 = vmax.f32 %v450, 0.0
  %v669 = vmax.f32 %v453, 0.0
  %v670 = vmax.f32 %v458, 0.0
  %v671 = vmax.f32 %v461, 0.0
  %v672 = vmax.f32 %v466, 0.0
  %v673 = vmax.f32 %v469, 0.0
  %v674 = vmax.f32 %v474, 0.0
  %v675 = vmax.f32 %v477, 0.0
  %v676 = vmax.f32 %v482, 0.0
  %v677 = vmax.f32 %v485, 0.0
  %v678 = vmax.f32 %v490, 0.0
  %v679 = vmax.f32 %v493, 0.0
  %v680 = vmax.f32 %v498, 0.0
  %v681 = vmax.f32 %v501, 0.0
  %v682 = vmax.f32 %v506, 0.0
  %v683 = vmax.f32 %v509, 0.0
  %v684 = vmax.f32 %v514, 0.0
  %v685 = vmax.f32 %v517, 0.0
  %v686 = vmax.f32 %v522, 0.0
  %v687 = vmax.f32 %v525, 0.0
  %v688 = vmax.f32 %v530, 0.0
  %v689 = vmax.f32 %v533, 0.0
  %v690 = vmax.f32 %v538, 0.0
  %v691 = vmax.f32 %v541, 0.0
  %v692 = vmax.f32 %v546, 0.0
  %v693 = vmax.f32 %v549, 0.0
  %v694 = vmax.f32 %v554, 0.0
  %v695 = vmax.f32 %v557, 0.0
  %v696 = vmax.f32 %v562, 0.0
  %v697 = vmax.f32 %v565, 0.0
  %v698 = vmax.f32 %v570, 0.0
  %v699 = vmax.f32 %v573, 0.0
  %v700 = vmax.f32 %v578, 0.0
  %v701 = vmax.f32 %v581, 0.0
  %v702 = vmax.f32 %v586, 0.0
  %v703 = vmax.f32 %v589, 0.0
  %v704 = vmax.f32 %v594, 0.0
  %v705 = vmax.f32 %v597, 0.0
  %v706 = vmax.f32 %v602, 0.0
  %v707 = vmax.f32 %v605, 0.0
  %v708 = vmax.f32 %v610, 0.0
  %v709 = vmax.f32 %v613, 0.0
  %v710 = vmax.f32 %v618, 0.0
  %v711 = vmax.f32 %v621, 0.0
  %v712 = vmax.f32 %v626, 0.0
  %v713 = vmax.f32 %v629, 0.0
  %v714 = vmax.f32 %v634, 0.0
  %v715 = vmax.f32 %v637, 0.0
  %v716 = vmax.f32 %v642, 0.0
  %v717 = vmax.f32 %v645, 0.0
  %v718 = vmax.f32 %v650, 0.0
  %v719 = vmax.f32 %v653, 0.0
  %v720 = vsel %vm270, %v656, 0.0
  %v721 = vsel %vm270, %v657, 0.0
  %v722 = vadd.f32 %v720, %v721
  %v723 = vsel %vm270, %v658, 0.0
  %v724 = vadd.f32 %v722, %v723
  %v725 = vsel %vm270, %v659, 0.0
  %v726 = vadd.f32 %v724, %v725
  %v727 = vsel %vm270, %v660, 0.0
  %v728 = vadd.f32 %v726, %v727
  %v729 = vsel %vm270, %v661, 0.0
  %v730 = vadd.f32 %v728, %v729
  %v731 = vsel %vm270, %v662, 0.0
  %v732 = vadd.f32 %v730, %v731
  %v733 = vsel %vm270, %v663, 0.0
  %v734 = vadd.f32 %v732, %v733
  %v735 = vrot.slane %v734, 4
  %v736 = vadd.f32 %v734, %v735
  %v737 = vrot.slane %v736, 2
  %v738 = vadd.f32 %v736, %v737
  %v739 = vrot.slane %v738, 1
  %v740 = vadd.f32 %v738, %v739
  %v741 = vsel %vm270, %v664, 0.0
  %v742 = vsel %vm270, %v665, 0.0
  %v743 = vadd.f32 %v741, %v742
  %v744 = vsel %vm270, %v666, 0.0
  %v745 = vadd.f32 %v743, %v744
  %v746 = vsel %vm270, %v667, 0.0
  %v747 = vadd.f32 %v745, %v746
  %v748 = vsel %vm270, %v668, 0.0
  %v749 = vadd.f32 %v747, %v748
  %v750 = vsel %vm270, %v669, 0.0
  %v751 = vadd.f32 %v749, %v750
  %v752 = vsel %vm270, %v670, 0.0
  %v753 = vadd.f32 %v751, %v752
  %v754 = vsel %vm270, %v671, 0.0
  %v755 = vadd.f32 %v753, %v754
  %v756 = vrot.slane %v755, 4
  %v757 = vadd.f32 %v755, %v756
  %v758 = vrot.slane %v757, 2
  %v759 = vadd.f32 %v757, %v758
  %v760 = vrot.slane %v759, 1
  %v761 = vadd.f32 %v759, %v760
  %v762 = vsel %vm270, %v672, 0.0
  %v763 = vsel %vm270, %v673, 0.0
  %v764 = vadd.f32 %v762, %v763
  %v765 = vsel %vm270, %v674, 0.0
  %v766 = vadd.f32 %v764, %v765
  %v767 = vsel %vm270, %v675, 0.0
  %v768 = vadd.f32 %v766, %v767
  %v769 = vsel %vm270, %v676, 0.0
  %v770 = vadd.f32 %v768, %v769
  %v771 = vsel %vm270, %v677, 0.0
  %v772 = vadd.f32 %v770, %v771
  %v773 = vsel %vm270, %v678, 0.0
  %v774 = vadd.f32 %v772, %v773
  %v775 = vsel %vm270, %v679, 0.0
  %v776 = vadd.f32 %v774, %v775
  %v777 = vrot.slane %v776, 4
  %v778 = vadd.f32 %v776, %v777
  %v779 = vrot.slane %v778, 2
  %v780 = vadd.f32 %v778, %v779
  %v781 = vrot.slane %v780, 1
  %v782 = vadd.f32 %v780, %v781
  %v783 = vsel %vm270, %v680, 0.0
  %v784 = vsel %vm270, %v681, 0.0
  %v785 = vadd.f32 %v783, %v784
  %v786 = vsel %vm270, %v682, 0.0
  %v787 = vadd.f32 %v785, %v786
  %v788 = vsel %vm270, %v683, 0.0
  %v789 = vadd.f32 %v787, %v788
  %v790 = vsel %vm270, %v684, 0.0
  %v791 = vadd.f32 %v789, %v790
  %v792 = vsel %vm270, %v685, 0.0
  %v793 = vadd.f32 %v791, %v792
  %v794 = vsel %vm270, %v686, 0.0
  %v795 = vadd.f32 %v793, %v794
  %v796 = vsel %vm270, %v687, 0.0
  %v797 = vadd.f32 %v795, %v796
  %v798 = vrot.slane %v797, 4
  %v799 = vadd.f32 %v797, %v798
  %v800 = vrot.slane %v799, 2
  %v801 = vadd.f32 %v799, %v800
  %v802 = vrot.slane %v801, 1
  %v803 = vadd.f32 %v801, %v802
  %v804 = vsel %vm270, %v688, 0.0
  %v805 = vsel %vm270, %v689, 0.0
  %v806 = vadd.f32 %v804, %v805
  %v807 = vsel %vm270, %v690, 0.0
  %v808 = vadd.f32 %v806, %v807
  %v809 = vsel %vm270, %v691, 0.0
  %v810 = vadd.f32 %v808, %v809
  %v811 = vsel %vm270, %v692, 0.0
  %v812 = vadd.f32 %v810, %v811
  %v813 = vsel %vm270, %v693, 0.0
  %v814 = vadd.f32 %v812, %v813
  %v815 = vsel %vm270, %v694, 0.0
  %v816 = vadd.f32 %v814, %v815
  %v817 = vsel %vm270, %v695, 0.0
  %v818 = vadd.f32 %v816, %v817
  %v819 = vrot.slane %v818, 4
  %v820 = vadd.f32 %v818, %v819
  %v821 = vrot.slane %v820, 2
  %v822 = vadd.f32 %v820, %v821
  %v823 = vrot.slane %v822, 1
  %v824 = vadd.f32 %v822, %v823
  %v825 = vsel %vm270, %v696, 0.0
  %v826 = vsel %vm270, %v697, 0.0
  %v827 = vadd.f32 %v825, %v826
  %v828 = vsel %vm270, %v698, 0.0
  %v829 = vadd.f32 %v827, %v828
  %v830 = vsel %vm270, %v699, 0.0
  %v831 = vadd.f32 %v829, %v830
  %v832 = vsel %vm270, %v700, 0.0
  %v833 = vadd.f32 %v831, %v832
  %v834 = vsel %vm270, %v701, 0.0
  %v835 = vadd.f32 %v833, %v834
  %v836 = vsel %vm270, %v702, 0.0
  %v837 = vadd.f32 %v835, %v836
  %v838 = vsel %vm270, %v703, 0.0
  %v839 = vadd.f32 %v837, %v838
  %v840 = vrot.slane %v839, 4
  %v841 = vadd.f32 %v839, %v840
  %v842 = vrot.slane %v841, 2
  %v843 = vadd.f32 %v841, %v842
  %v844 = vrot.slane %v843, 1
  %v845 = vadd.f32 %v843, %v844
  %v846 = vsel %vm270, %v704, 0.0
  %v847 = vsel %vm270, %v705, 0.0
  %v848 = vadd.f32 %v846, %v847
  %v849 = vsel %vm270, %v706, 0.0
  %v850 = vadd.f32 %v848, %v849
  %v851 = vsel %vm270, %v707, 0.0
  %v852 = vadd.f32 %v850, %v851
  %v853 = vsel %vm270, %v708, 0.0
  %v854 = vadd.f32 %v852, %v853
  %v855 = vsel %vm270, %v709, 0.0
  %v856 = vadd.f32 %v854, %v855
  %v857 = vsel %vm270, %v710, 0.0
  %v858 = vadd.f32 %v856, %v857
  %v859 = vsel %vm270, %v711, 0.0
  %v860 = vadd.f32 %v858, %v859
  %v861 = vrot.slane %v860, 4
  %v862 = vadd.f32 %v860, %v861
  %v863 = vrot.slane %v862, 2
  %v864 = vadd.f32 %v862, %v863
  %v865 = vrot.slane %v864, 1
  %v866 = vadd.f32 %v864, %v865
  %v867 = vsel %vm270, %v712, 0.0
  %v868 = vsel %vm270, %v713, 0.0
  %v869 = vadd.f32 %v867, %v868
  %v870 = vsel %vm270, %v714, 0.0
  %v871 = vadd.f32 %v869, %v870
  %v872 = vsel %vm270, %v715, 0.0
  %v873 = vadd.f32 %v871, %v872
  %v874 = vsel %vm270, %v716, 0.0
  %v875 = vadd.f32 %v873, %v874
  %v876 = vsel %vm270, %v717, 0.0
  %v877 = vadd.f32 %v875, %v876
  %v878 = vsel %vm270, %v718, 0.0
  %v879 = vadd.f32 %v877, %v878
  %v880 = vsel %vm270, %v719, 0.0
  %v881 = vadd.f32 %v879, %v880
  %v882 = vrot.slane %v881, 4
  %v883 = vadd.f32 %v881, %v882
  %v884 = vrot.slane %v883, 2
  %v885 = vadd.f32 %v883, %v884
  %v886 = vrot.slane %v885, 1
  %v887 = vadd.f32 %v885, %v886
  %v888 = vmul.f32 %v740, 0.015625
  %v889 = vmul.f32 %v761, 0.015625
  %v890 = vmul.f32 %v782, 0.015625
  %v891 = vmul.f32 %v803, 0.015625
  %v892 = vmul.f32 %v824, 0.015625
  %v893 = vmul.f32 %v845, 0.015625
  %v894 = vmul.f32 %v866, 0.015625
  %v895 = vmul.f32 %v887, 0.015625
  %v896 = vld [vmem:[%s2] sm:$0xf]
  %897 = vst [vmem:[#allocation2] sm:$0xf] %v896
  %v898 = vpack.c.bf16 %v888, %v888
  %v899 = vpack.c.bf16 %v889, %v889
  %v900 = vpack.c.bf16 %v890, %v890
  %v901 = vpack.c.bf16 %v891, %v891
  %v902 = vpack.c.bf16 %v892, %v892
  %v903 = vpack.c.bf16 %v893, %v893
  %v904 = vpack.c.bf16 %v894, %v894
  %v905 = vpack.c.bf16 %v895, %v895
  %v914 = vunpack.c.l.b16 %v898
  %v915 = vunpack.c.l.b16 %v899
  %v916 = vunpack.c.l.b16 %v900
  %v917 = vunpack.c.l.b16 %v901
  %v918 = vunpack.c.l.b16 %v902
  %v919 = vunpack.c.l.b16 %v903
  %v920 = vunpack.c.l.b16 %v904
  %v921 = vunpack.c.l.b16 %v905
  %v922 = vpack.c.b16 %v914, %v914
  %v923 = vpack.c.b16 %v915, %v915
  %v924 = vpack.c.b16 %v916, %v916
  %v925 = vpack.c.b16 %v917, %v917
  %v926 = vpack.c.b16 %v918, %v918
  %v927 = vpack.c.b16 %v919, %v919
  %v928 = vpack.c.b16 %v920, %v920
  %v929 = vpack.c.b16 %v921, %v921
  %v930 = vunpack.c.l.b16 %v922
  %v931 = vunpack.c.l.b16 %v923
  %v932 = vunpack.c.l.b16 %v924
  %v933 = vunpack.c.l.b16 %v925
  %v934 = vunpack.c.l.b16 %v926
  %v935 = vunpack.c.l.b16 %v927
  %v936 = vunpack.c.l.b16 %v928
  %v937 = vunpack.c.l.b16 %v929
  %vm938 = vcmask 1041409
  %v939 = vsel %vm938, %v931, %v930
  %vm940 = vcmask 1042434
  %v941 = vsel %vm940, %v932, %v939
  %vm942 = vcmask 1043459
  %v943 = vsel %vm942, %v933, %v941
  %vm944 = vcmask 1044484
  %v945 = vsel %vm944, %v934, %v943
  %vm946 = vcmask 1045509
  %v947 = vsel %vm946, %v935, %v945
  %vm948 = vcmask 1046534
  %v949 = vsel %vm948, %v936, %v947
  %vm950 = vcmask 1047559
  %v951 = vsel %vm950, %v937, %v949
  %v952 = vpack.c.b16 %v951, %v951
  %953 = vrot.lane.b32.xlu0 %v952, 96
  %v954 = vpop.permute.xlu0 %953
  %vm956 = vcmask 1044224
  %957 = vst.msk [vmem:[#allocation2] sm:$0xf] %vm956, %v954
  %v958 = vld [vmem:[#allocation2] sm:$0xf]
  %v959 = vld [vmem:[%s3] sm:$0xf]
  %v960 = vld [vmem:[%s3 + $0x4] sm:$0xf]
  %v961 = vld [vmem:[%s3 + $0x8] sm:$0xf]
  %v962 = vld [vmem:[%s3 + $0xc] sm:$0xf]
  %v963 = vld [vmem:[%s3 + $0x10] sm:$0xf]
  %v964 = vld [vmem:[%s3 + $0x14] sm:$0xf]
  %v965 = vld [vmem:[%s3 + $0x18] sm:$0xf]
  %v966 = vld [vmem:[%s3 + $0x1c] sm:$0xf]
  %v967 = vld [vmem:[%s3 + $0x20] sm:$0xf]
  %v968 = vld [vmem:[%s3 + $0x24] sm:$0xf]
  %v969 = vld [vmem:[%s3 + $0x28] sm:$0xf]
  %v970 = vld [vmem:[%s3 + $0x2c] sm:$0xf]
  %v971 = vld [vmem:[%s3 + $0x30] sm:$0xf]
  %v972 = vld [vmem:[%s3 + $0x34] sm:$0xf]
  %v973 = vld [vmem:[%s3 + $0x38] sm:$0xf]
  %v974 = vld [vmem:[%s3 + $0x3c] sm:$0xf]
  %v991 = vunpack.c.l.b16 %v959
  %v992 = vunpack.c.l.b16 %v960
  %v993 = vunpack.c.l.b16 %v961
  %v994 = vunpack.c.l.b16 %v962
  %v995 = vunpack.c.l.b16 %v963
  %v996 = vunpack.c.l.b16 %v964
  %v997 = vunpack.c.l.b16 %v965
  %v998 = vunpack.c.l.b16 %v966
  %v999 = vunpack.c.l.b16 %v967
  %v1000 = vunpack.c.l.b16 %v968
  %v1001 = vunpack.c.l.b16 %v969
  %v1002 = vunpack.c.l.b16 %v970
  %v1003 = vunpack.c.l.b16 %v971
  %v1004 = vunpack.c.l.b16 %v972
  %v1005 = vunpack.c.l.b16 %v973
  %v1006 = vunpack.c.l.b16 %v974
  %v1007 = vpack.c.b16 %v992, %v991
  %v1008 = vpack.c.b16 %v994, %v993
  %v1009 = vpack.c.b16 %v996, %v995
  %v1010 = vpack.c.b16 %v998, %v997
  %v1011 = vpack.c.b16 %v1000, %v999
  %v1012 = vpack.c.b16 %v1002, %v1001
  %v1013 = vpack.c.b16 %v1004, %v1003
  %v1014 = vpack.c.b16 %v1006, %v1005
  %1023 = vmatprep.subr.bf16.mxu0 0
  %1024 = vmatpush1.bf16.msra.mxu0 %v1007
  %1025 = vmatprep.subr.bf16.mxu0 0
  %1026 = vmatpush1.bf16.msra.mxu0 %v1008
  %1027 = vmatprep.subr.bf16.mxu0 0
  %1028 = vmatpush1.bf16.msra.mxu0 %v1009
  %1029 = vmatprep.subr.bf16.mxu0 0
  %1030 = vmatpush1.bf16.msra.mxu0 %v1010
  %1031 = vmatprep.subr.bf16.mxu0 0
  %1032 = vmatpush1.bf16.msra.mxu0 %v1011
  %1033 = vmatprep.subr.bf16.mxu0 0
  %1034 = vmatpush1.bf16.msra.mxu0 %v1012
  %1035 = vmatprep.subr.bf16.mxu0 0
  %1036 = vmatpush1.bf16.msra.mxu0 %v1013
  %1037 = vmatprep.subr.bf16.mxu0 0
  %1038 = vmatpush1.bf16.msra.mxu0 %v1014
  %1039 = vmatprep.subr.bf16.mxu0 0
  %1040 = vmatpush1.bf16.msra.mxu0 0
  %1041 = vmatprep.subr.bf16.mxu0 0
  %1042 = vmatpush1.bf16.msra.mxu0 0
  %1043 = vmatprep.subr.bf16.mxu0 0
  %1044 = vmatpush1.bf16.msra.mxu0 0
  %1045 = vmatprep.subr.bf16.mxu0 0
  %1046 = vmatpush1.bf16.msra.mxu0 0
  %1047 = vmatprep.subr.bf16.mxu0 0
  %1048 = vmatpush1.bf16.msra.mxu0 0
  %1049 = vmatprep.subr.bf16.mxu0 0
  %1050 = vmatpush1.bf16.msra.mxu0 0
  %1051 = vmatprep.subr.bf16.mxu0 0
  %1052 = vmatpush1.bf16.msra.mxu0 0
  %1053 = vmatprep.subr.bf16.mxu0 0
  %1054 = vmatpush1.bf16.msra.mxu0 0
  %1055 = vmatprep.mubr.bf16.mxu0 0
  %1056 = vmatmul.mubr.bf16.gmra.mrb[0].mxu0 %v958
  %v1057 = vpop.f32.mrb[0].mxu0
  %v1058 = vadd.f32 0.0, %v1057
  %v1059 = vpop.f32.mrb[0].mxu0
  %v1060 = vpop.f32.mrb[0].mxu0
  %v1061 = vpop.f32.mrb[0].mxu0
  %1062 = vdwg.mxu0
  %v1063 = vmax.f32 %v1058, 0.0
  %v1064 = vpack.c.bf16 %v1063, %v1063
  %v1065 = vld [vmem:[%s4] sm:$0xf]
  %v1066 = vld [vmem:[%s4 + $0x4] sm:$0xf]
  %v1067 = vld [vmem:[%s4 + $0x8] sm:$0xf]
  %v1068 = vld [vmem:[%s4 + $0xc] sm:$0xf]
  %v1069 = vld [vmem:[%s4 + $0x10] sm:$0xf]
  %v1070 = vld [vmem:[%s4 + $0x14] sm:$0xf]
  %v1071 = vld [vmem:[%s4 + $0x18] sm:$0xf]
  %v1072 = vld [vmem:[%s4 + $0x1c] sm:$0xf]
  %v1073 = vld [vmem:[%s4 + $0x20] sm:$0xf]
  %v1074 = vld [vmem:[%s4 + $0x24] sm:$0xf]
  %v1075 = vld [vmem:[%s4 + $0x28] sm:$0xf]
  %v1076 = vld [vmem:[%s4 + $0x2c] sm:$0xf]
  %v1077 = vld [vmem:[%s4 + $0x30] sm:$0xf]
  %v1078 = vld [vmem:[%s4 + $0x34] sm:$0xf]
  %v1079 = vld [vmem:[%s4 + $0x38] sm:$0xf]
  %v1080 = vld [vmem:[%s4 + $0x3c] sm:$0xf]
  %v1081 = vld [vmem:[%s5] sm:$0x1]
  %v1083 = vlaneseq
  %v1084 = vshrl.u32 %v1083, 7
  %v1085 = vsub.s32 0, %v1084
  %v1086 = vrot.slane %v1081, %v1085
  %v1104 = vunpack.c.l.b16 %v1065
  %v1105 = vunpack.c.l.b16 %v1066
  %v1106 = vunpack.c.l.b16 %v1067
  %v1107 = vunpack.c.l.b16 %v1068
  %v1108 = vunpack.c.l.b16 %v1069
  %v1109 = vunpack.c.l.b16 %v1070
  %v1110 = vunpack.c.l.b16 %v1071
  %v1111 = vunpack.c.l.b16 %v1072
  %v1112 = vunpack.c.l.b16 %v1073
  %v1113 = vunpack.c.l.b16 %v1074
  %v1114 = vunpack.c.l.b16 %v1075
  %v1115 = vunpack.c.l.b16 %v1076
  %v1116 = vunpack.c.l.b16 %v1077
  %v1117 = vunpack.c.l.b16 %v1078
  %v1118 = vunpack.c.l.b16 %v1079
  %v1119 = vunpack.c.l.b16 %v1080
  %v1120 = vpack.c.b16 %v1105, %v1104
  %v1121 = vpack.c.b16 %v1107, %v1106
  %v1122 = vpack.c.b16 %v1109, %v1108
  %v1123 = vpack.c.b16 %v1111, %v1110
  %v1124 = vpack.c.b16 %v1113, %v1112
  %v1125 = vpack.c.b16 %v1115, %v1114
  %v1126 = vpack.c.b16 %v1117, %v1116
  %v1127 = vpack.c.b16 %v1119, %v1118
  %1136 = vmatprep.subr.bf16.mxu0 0
  %1137 = vmatpush1.bf16.msra.mxu0 %v1120
  %1138 = vmatprep.subr.bf16.mxu0 0
  %1139 = vmatpush1.bf16.msra.mxu0 %v1121
  %1140 = vmatprep.subr.bf16.mxu0 0
  %1141 = vmatpush1.bf16.msra.mxu0 %v1122
  %1142 = vmatprep.subr.bf16.mxu0 0
  %1143 = vmatpush1.bf16.msra.mxu0 %v1123
  %1144 = vmatprep.subr.bf16.mxu0 0
  %1145 = vmatpush1.bf16.msra.mxu0 %v1124
  %1146 = vmatprep.subr.bf16.mxu0 0
  %1147 = vmatpush1.bf16.msra.mxu0 %v1125
  %1148 = vmatprep.subr.bf16.mxu0 0
  %1149 = vmatpush1.bf16.msra.mxu0 %v1126
  %1150 = vmatprep.subr.bf16.mxu0 0
  %1151 = vmatpush1.bf16.msra.mxu0 %v1127
  %1152 = vmatprep.subr.bf16.mxu0 0
  %1153 = vmatpush1.bf16.msra.mxu0 0
  %1154 = vmatprep.subr.bf16.mxu0 0
  %1155 = vmatpush1.bf16.msra.mxu0 0
  %1156 = vmatprep.subr.bf16.mxu0 0
  %1157 = vmatpush1.bf16.msra.mxu0 0
  %1158 = vmatprep.subr.bf16.mxu0 0
  %1159 = vmatpush1.bf16.msra.mxu0 0
  %1160 = vmatprep.subr.bf16.mxu0 0
  %1161 = vmatpush1.bf16.msra.mxu0 0
  %1162 = vmatprep.subr.bf16.mxu0 0
  %1163 = vmatpush1.bf16.msra.mxu0 0
  %1164 = vmatprep.subr.bf16.mxu0 0
  %1165 = vmatpush1.bf16.msra.mxu0 0
  %1166 = vmatprep.subr.bf16.mxu0 0
  %1167 = vmatpush1.bf16.msra.mxu0 0
  %1168 = vmatprep.mubr.bf16.mxu0 0
  %1169 = vmatmul.mubr.bf16.gmra.mrb[0].mxu0 %v1064
  %v1170 = vpop.f32.mrb[0].mxu0
  %v1171 = vadd.f32 %v1086, %v1170
  %v1172 = vpop.f32.mrb[0].mxu0
  %v1173 = vpop.f32.mrb[0].mxu0
  %v1174 = vpop.f32.mrb[0].mxu0
  %1175 = vdwg.mxu0
  %v1176 = vmax.f32 %v1171, 0.0
  %v1177 = vpack.c.bf16 %v1176, %v1176
  %v1178 = vld [vmem:[%s6] sm:$0xf]
  %v1179 = vld [vmem:[%s6 + $0x4] sm:$0xf]
  %v1180 = vld [vmem:[%s6 + $0x8] sm:$0xf]
  %v1181 = vld [vmem:[%s6 + $0xc] sm:$0xf]
  %v1182 = vld [vmem:[%s6 + $0x10] sm:$0xf]
  %v1183 = vld [vmem:[%s6 + $0x14] sm:$0xf]
  %v1184 = vld [vmem:[%s6 + $0x18] sm:$0xf]
  %v1185 = vld [vmem:[%s6 + $0x1c] sm:$0xf]
  %v1186 = vld [vmem:[%s6 + $0x20] sm:$0xf]
  %v1187 = vld [vmem:[%s6 + $0x24] sm:$0xf]
  %v1188 = vld [vmem:[%s6 + $0x28] sm:$0xf]
  %v1189 = vld [vmem:[%s6 + $0x2c] sm:$0xf]
  %v1190 = vld [vmem:[%s6 + $0x30] sm:$0xf]
  %v1191 = vld [vmem:[%s6 + $0x34] sm:$0xf]
  %v1192 = vld [vmem:[%s6 + $0x38] sm:$0xf]
  %v1193 = vld [vmem:[%s6 + $0x3c] sm:$0xf]
  %v1194 = vld [vmem:[%s7] sm:$0x1]
  %v1196 = vlaneseq
  %v1197 = vshrl.u32 %v1196, 7
  %v1198 = vsub.s32 0, %v1197
  %v1199 = vrot.slane %v1194, %v1198
  %v1217 = vunpack.c.l.b16 %v1178
  %v1218 = vunpack.c.l.b16 %v1179
  %v1219 = vunpack.c.l.b16 %v1180
  %v1220 = vunpack.c.l.b16 %v1181
  %v1221 = vunpack.c.l.b16 %v1182
  %v1222 = vunpack.c.l.b16 %v1183
  %v1223 = vunpack.c.l.b16 %v1184
  %v1224 = vunpack.c.l.b16 %v1185
  %v1225 = vunpack.c.l.b16 %v1186
  %v1226 = vunpack.c.l.b16 %v1187
  %v1227 = vunpack.c.l.b16 %v1188
  %v1228 = vunpack.c.l.b16 %v1189
  %v1229 = vunpack.c.l.b16 %v1190
  %v1230 = vunpack.c.l.b16 %v1191
  %v1231 = vunpack.c.l.b16 %v1192
  %v1232 = vunpack.c.l.b16 %v1193
  %v1233 = vpack.c.b16 %v1218, %v1217
  %v1234 = vpack.c.b16 %v1220, %v1219
  %v1235 = vpack.c.b16 %v1222, %v1221
  %v1236 = vpack.c.b16 %v1224, %v1223
  %v1237 = vpack.c.b16 %v1226, %v1225
  %v1238 = vpack.c.b16 %v1228, %v1227
  %v1239 = vpack.c.b16 %v1230, %v1229
  %v1240 = vpack.c.b16 %v1232, %v1231
  %1249 = vmatprep.subr.bf16.mxu0 0
  %1250 = vmatpush1.bf16.msra.mxu0 %v1233
  %1251 = vmatprep.subr.bf16.mxu0 0
  %1252 = vmatpush1.bf16.msra.mxu0 %v1234
  %1253 = vmatprep.subr.bf16.mxu0 0
  %1254 = vmatpush1.bf16.msra.mxu0 %v1235
  %1255 = vmatprep.subr.bf16.mxu0 0
  %1256 = vmatpush1.bf16.msra.mxu0 %v1236
  %1257 = vmatprep.subr.bf16.mxu0 0
  %1258 = vmatpush1.bf16.msra.mxu0 %v1237
  %1259 = vmatprep.subr.bf16.mxu0 0
  %1260 = vmatpush1.bf16.msra.mxu0 %v1238
  %1261 = vmatprep.subr.bf16.mxu0 0
  %1262 = vmatpush1.bf16.msra.mxu0 %v1239
  %1263 = vmatprep.subr.bf16.mxu0 0
  %1264 = vmatpush1.bf16.msra.mxu0 %v1240
  %1265 = vmatprep.subr.bf16.mxu0 0
  %1266 = vmatpush1.bf16.msra.mxu0 0
  %1267 = vmatprep.subr.bf16.mxu0 0
  %1268 = vmatpush1.bf16.msra.mxu0 0
  %1269 = vmatprep.subr.bf16.mxu0 0
  %1270 = vmatpush1.bf16.msra.mxu0 0
  %1271 = vmatprep.subr.bf16.mxu0 0
  %1272 = vmatpush1.bf16.msra.mxu0 0
  %1273 = vmatprep.subr.bf16.mxu0 0
  %1274 = vmatpush1.bf16.msra.mxu0 0
  %1275 = vmatprep.subr.bf16.mxu0 0
  %1276 = vmatpush1.bf16.msra.mxu0 0
  %1277 = vmatprep.subr.bf16.mxu0 0
  %1278 = vmatpush1.bf16.msra.mxu0 0
  %1279 = vmatprep.subr.bf16.mxu0 0
  %1280 = vmatpush1.bf16.msra.mxu0 0
  %1281 = vmatprep.mubr.bf16.mxu0 0
  %1282 = vmatmul.mubr.bf16.gmra.mrb[0].mxu0 %v1177
  %v1283 = vpop.f32.mrb[0].mxu0
  %v1284 = vadd.f32 %v1199, %v1283
  %v1285 = vpop.f32.mrb[0].mxu0
  %v1286 = vpop.f32.mrb[0].mxu0
  %v1287 = vpop.f32.mrb[0].mxu0
  %1288 = vdwg.mxu0
  %1289 = vst [vmem:[%s8] sm:$0xff] %v1284
  // Predicated region
  $region34: #{forward.1} parent=0 // pred_check
    _
  $region35: #{forward.1} parent=0 // pred_check_branch
    %1291 = sbr.rel (0) target = $region37
  $region36: #{forward.1} parent=0 // pred_region
    _
  $region37: #{forward.1} parent=0 // pred_fallthru
    _
  // Predicated region
  $region38: #{forward.1} parent=0 // pred_check
    _
  $region39: #{forward.1} parent=0 // pred_check_branch
    %1293 = sbr.rel (0) target = $region41
  $region40: #{forward.1} parent=0 // pred_region
    _
  $region41: #{forward.1} parent=0 // pred_fallthru
    _

</llo_original>
